<compile_context>
chip_gen: v6e
topology: v6e:2x2x1
jax: 0.10.0
libtpu: 0.0.40
codegen_flags: <defaults>
</compile_context>

<pallas_src>
import jax
import jax.numpy as jnp
from jax.experimental import pallas as pl
from jax.experimental.pallas import tpu as pltpu

_EPS = 1e-3                                   # CharbonnierLoss eps
_K1 = (0.05, 0.25, 0.4, 0.25, 0.05)           # 1-D Gaussian taps (outer product = 5x5 kernel)


def _shift_clamped(x, offset, axis):
    """result[..., i, ...] = x[..., clamp(i + offset, 0, n-1), ...].

    Built from same-shape concatenations of the interior slice and the
    replicated edge row/column, so every intermediate keeps the block's
    sublane/lane extent (no (W+4)-wide relayout buffers).
    """
    n = x.shape[axis]
    if offset == 0:
        return x

    def slc(a, b):
        idx = [slice(None)] * x.ndim
        idx[axis] = slice(a, b)
        return x[tuple(idx)]

    if offset < 0:
        k = -offset
        edge = slc(0, 1)                       # first row/col, replicated
        parts = [edge] * k + [slc(0, n - k)]
    else:
        k = offset
        edge = slc(n - 1, n)                   # last row/col, replicated
        parts = [slc(k, n)] + [edge] * k
    return jnp.concatenate(parts, axis=axis)


def _gauss_blur(img):
    """Depthwise 5x5 Gaussian blur with replicate padding, on (P, H, W).

    Separable: 5-tap conv along rows (sublane axis) then along columns (lane
    axis); per-axis index clamping is exactly equivalent to the 2-D
    replicate-pad + 5x5 conv because the kernel is an outer product.
    """
    # vertical pass (axis 1 = sublane)
    r = (_K1[0] * _shift_clamped(img, -2, 1)
         + _K1[1] * _shift_clamped(img, -1, 1)
         + _K1[2] * img
         + _K1[3] * _shift_clamped(img, 1, 1)
         + _K1[4] * _shift_clamped(img, 2, 1))
    # horizontal pass (axis 2 = lane)
    out = (_K1[0] * _shift_clamped(r, -2, 2)
           + _K1[1] * _shift_clamped(r, -1, 2)
           + _K1[2] * r
           + _K1[3] * _shift_clamped(r, 1, 2)
           + _K1[4] * _shift_clamped(r, 2, 2))
    return out


def _laplacian(d):
    """laplacian_kernel(d) from EdgeLoss for a (P, H, W) stack of planes."""
    filtered = _gauss_blur(d)
    # new_filter[::2, ::2] = filtered[::2, ::2] * 4, zero elsewhere.
    row = jax.lax.broadcasted_iota(jnp.int32, d.shape, 1)
    col = jax.lax.broadcasted_iota(jnp.int32, d.shape, 2)
    even = jnp.logical_and((row & 1) == 0, (col & 1) == 0)
    mask4 = jnp.where(even, 4.0, 0.0).astype(jnp.float32)   # {0,4}; built once
    filtered2 = _gauss_blur(filtered * mask4)                # single vmul mask
    return d - filtered2


def _edge_loss_kernel(x_ref, y_ref, out_ref):
    # x_ref / y_ref: (P, H, W) VMEM blocks; out_ref: (1, 1, 1) per-step partial.
    # Linearity: laplacian(x) - laplacian(y) == laplacian(x - y).
    d = x_ref[...].astype(jnp.float32) - y_ref[...].astype(jnp.float32)
    lap = _laplacian(d)
    charb = jnp.sqrt(lap * lap + _EPS * _EPS)
    out_ref[...] = jnp.sum(charb, keepdims=True)             # (1, 1, 1)


def _planes_per_step(bc, h, w, budget_bytes=16 * 1024 * 1024):
    """Largest divisor of bc such that ~12 live f32 planes per processed plane
    (2x pipelined input buffers for x and y, diff, blur temps, tap shifts,
    mask) stay within a conservative VMEM budget."""
    per_plane = h * w * 4 * 12
    max_p = max(1, budget_bytes // per_plane)
    best = 1
    for d in range(1, bc + 1):
        if bc % d == 0 and d <= max_p:
            best = d
    return best


def edge_loss(x, y):
    """EdgeLoss.forward(x, y) — x, y are NCHW (B, 3, H, W)."""
    B, C, H, W = x.shape
    bc = B * C
    xf = x.reshape(bc, H, W)          # dtype passthrough (no forced f32 cast)
    yf = y.reshape(bc, H, W)

    p = _planes_per_step(bc, H, W)
    g = bc // p

    partials = pl.pallas_call(
        _edge_loss_kernel,
        out_shape=jax.ShapeDtypeStruct((g, 1, 1), jnp.float32),
        grid=(g,),
        in_specs=[
            pl.BlockSpec((p, H, W), lambda i: (i, 0, 0)),
            pl.BlockSpec((p, H, W), lambda i: (i, 0, 0)),
        ],
        out_specs=pl.BlockSpec((1, 1, 1), lambda i: (i, 0, 0)),
        compiler_params=pltpu.CompilerParams(
            dimension_semantics=("parallel",),       # independent plane chunks
            vmem_limit_bytes=48 * 1024 * 1024,
        ),
    )(xf, yf)

    return jnp.sum(partials) / jnp.float32(bc * H * W)


def _ref_edge_loss(x, y):
    """Pure-JAX reference (full 5x5 conv, two separate Laplacians)."""
    C = x.shape[1]
    k1 = jnp.array(_K1, jnp.float32)
    k2 = jnp.outer(k1, k1)
    w = jnp.broadcast_to(k2[None, None], (C, 1, 5, 5))

    def conv_gauss(img):
        p = jnp.pad(img, ((0, 0), (0, 0), (2, 2), (2, 2)), mode="edge")
        return jax.lax.conv_general_dilated(
            p, w, window_strides=(1, 1), padding="VALID",
            dimension_numbers=("NCHW", "OIHW", "NCHW"),
            feature_group_count=C)

    def lap(img):
        f = conv_gauss(img)
        H, W = img.shape[2], img.shape[3]
        mask = (jnp.arange(H)[:, None] % 2 == 0) & (jnp.arange(W)[None, :] % 2 == 0)
        nf = jnp.where(mask[None, None], f * 4.0, 0.0)
        f2 = conv_gauss(nf)
        return img - f2

    d = lap(x) - lap(y)
    return jnp.mean(jnp.sqrt(d * d + _EPS * _EPS))


if __name__ == "__main__":
    key = jax.random.PRNGKey(0)
    kx, ky = jax.random.split(key)
    # channels must be 3 to match the repeated depthwise Gaussian kernel
    B, C, H, W = 2, 3, 16, 16
    x = jax.random.uniform(kx, (B, C, H, W), jnp.float32)
    y = jax.random.uniform(ky, (B, C, H, W), jnp.float32)

    loss = jax.block_until_ready(edge_loss(x, y))
    ref = jax.block_until_ready(_ref_edge_loss(x, y))
    assert abs(float(loss) - float(ref)) < 1e-5, (float(loss), float(ref))

    print("KERNEL_OK")
</pallas_src>

<mosaic_0001>
module attributes {stable_mosaic.version = 11 : i64} {
  func.func @_edge_loss_kernel(%arg0: i32, %arg1: memref<6x16x16xf32, #tpu.memory_space<vmem>>, %arg2: memref<6x16x16xf32, #tpu.memory_space<vmem>>, %arg3: memref<1x1x1xf32, #tpu.memory_space<vmem>>) attributes {dimension_semantics = [#tpu.dimension_semantics<parallel>], iteration_bounds = array<i64: 1>, scalar_prefetch = 0 : i64, scratch_operands = 0 : i64, tpu.core_type = #tpu.core_type<tc>, window_params = [{transform_indices = @transform_0, window_bounds = array<i64: 6, 16, 16>}, {transform_indices = @transform_1, window_bounds = array<i64: 6, 16, 16>}, {transform_indices = @transform_2, window_bounds = array<i64: 1, 1, 1>}]} {
    %c0 = arith.constant 0 : index
    %c0_0 = arith.constant 0 : index
    %c0_1 = arith.constant 0 : index
    %0 = vector.load %arg1[%c0, %c0_0, %c0_1] : memref<6x16x16xf32, #tpu.memory_space<vmem>>, vector<6x16x16xf32>
    %c0_2 = arith.constant 0 : index
    %c0_3 = arith.constant 0 : index
    %c0_4 = arith.constant 0 : index
    %1 = vector.load %arg2[%c0_2, %c0_3, %c0_4] : memref<6x16x16xf32, #tpu.memory_space<vmem>>, vector<6x16x16xf32>
    %2 = arith.subf %0, %1 : vector<6x16x16xf32>
    %3 = vector.extract_strided_slice %2 {offsets = [0, 0, 0], sizes = [6, 1, 16], strides = [1, 1, 1]} : vector<6x16x16xf32> to vector<6x1x16xf32>
    %4 = vector.extract_strided_slice %2 {offsets = [0, 0, 0], sizes = [6, 14, 16], strides = [1, 1, 1]} : vector<6x16x16xf32> to vector<6x14x16xf32>
    %5 = tpu.concatenate %3, %3, %4 in 1 : vector<6x1x16xf32>, vector<6x1x16xf32>, vector<6x14x16xf32> -> vector<6x16x16xf32>
    %cst = arith.constant 5.000000e-02 : f32
    %6 = vector.broadcast %cst : f32 to vector<6x16x16xf32>
    %7 = arith.mulf %6, %5 : vector<6x16x16xf32>
    %8 = vector.extract_strided_slice %2 {offsets = [0, 0, 0], sizes = [6, 1, 16], strides = [1, 1, 1]} : vector<6x16x16xf32> to vector<6x1x16xf32>
    %9 = vector.extract_strided_slice %2 {offsets = [0, 0, 0], sizes = [6, 15, 16], strides = [1, 1, 1]} : vector<6x16x16xf32> to vector<6x15x16xf32>
    %10 = tpu.concatenate %8, %9 in 1 : vector<6x1x16xf32>, vector<6x15x16xf32> -> vector<6x16x16xf32>
    %cst_5 = arith.constant 2.500000e-01 : f32
    %11 = vector.broadcast %cst_5 : f32 to vector<6x16x16xf32>
    %12 = arith.mulf %11, %10 : vector<6x16x16xf32>
    %13 = arith.addf %7, %12 : vector<6x16x16xf32>
    %cst_6 = arith.constant 4.000000e-01 : f32
    %14 = vector.broadcast %cst_6 : f32 to vector<6x16x16xf32>
    %15 = arith.mulf %14, %2 : vector<6x16x16xf32>
    %16 = arith.addf %13, %15 : vector<6x16x16xf32>
    %17 = vector.extract_strided_slice %2 {offsets = [0, 15, 0], sizes = [6, 1, 16], strides = [1, 1, 1]} : vector<6x16x16xf32> to vector<6x1x16xf32>
    %18 = vector.extract_strided_slice %2 {offsets = [0, 1, 0], sizes = [6, 15, 16], strides = [1, 1, 1]} : vector<6x16x16xf32> to vector<6x15x16xf32>
    %19 = tpu.concatenate %18, %17 in 1 : vector<6x15x16xf32>, vector<6x1x16xf32> -> vector<6x16x16xf32>
    %cst_7 = arith.constant 2.500000e-01 : f32
    %20 = vector.broadcast %cst_7 : f32 to vector<6x16x16xf32>
    %21 = arith.mulf %20, %19 : vector<6x16x16xf32>
    %22 = arith.addf %16, %21 : vector<6x16x16xf32>
    %23 = vector.extract_strided_slice %2 {offsets = [0, 15, 0], sizes = [6, 1, 16], strides = [1, 1, 1]} : vector<6x16x16xf32> to vector<6x1x16xf32>
    %24 = vector.extract_strided_slice %2 {offsets = [0, 2, 0], sizes = [6, 14, 16], strides = [1, 1, 1]} : vector<6x16x16xf32> to vector<6x14x16xf32>
    %25 = tpu.concatenate %24, %23, %23 in 1 : vector<6x14x16xf32>, vector<6x1x16xf32>, vector<6x1x16xf32> -> vector<6x16x16xf32>
    %cst_8 = arith.constant 5.000000e-02 : f32
    %26 = vector.broadcast %cst_8 : f32 to vector<6x16x16xf32>
    %27 = arith.mulf %26, %25 : vector<6x16x16xf32>
    %28 = arith.addf %22, %27 : vector<6x16x16xf32>
    %29 = vector.extract_strided_slice %28 {offsets = [0, 0, 0], sizes = [6, 16, 1], strides = [1, 1, 1]} : vector<6x16x16xf32> to vector<6x16x1xf32>
    %30 = vector.extract_strided_slice %28 {offsets = [0, 0, 0], sizes = [6, 16, 14], strides = [1, 1, 1]} : vector<6x16x16xf32> to vector<6x16x14xf32>
    %31 = tpu.concatenate %29, %29, %30 in 2 : vector<6x16x1xf32>, vector<6x16x1xf32>, vector<6x16x14xf32> -> vector<6x16x16xf32>
    %cst_9 = arith.constant 5.000000e-02 : f32
    %32 = vector.broadcast %cst_9 : f32 to vector<6x16x16xf32>
    %33 = arith.mulf %32, %31 : vector<6x16x16xf32>
    %34 = vector.extract_strided_slice %28 {offsets = [0, 0, 0], sizes = [6, 16, 1], strides = [1, 1, 1]} : vector<6x16x16xf32> to vector<6x16x1xf32>
    %35 = vector.extract_strided_slice %28 {offsets = [0, 0, 0], sizes = [6, 16, 15], strides = [1, 1, 1]} : vector<6x16x16xf32> to vector<6x16x15xf32>
    %36 = tpu.concatenate %34, %35 in 2 : vector<6x16x1xf32>, vector<6x16x15xf32> -> vector<6x16x16xf32>
    %cst_10 = arith.constant 2.500000e-01 : f32
    %37 = vector.broadcast %cst_10 : f32 to vector<6x16x16xf32>
    %38 = arith.mulf %37, %36 : vector<6x16x16xf32>
    %39 = arith.addf %33, %38 : vector<6x16x16xf32>
    %cst_11 = arith.constant 4.000000e-01 : f32
    %40 = vector.broadcast %cst_11 : f32 to vector<6x16x16xf32>
    %41 = arith.mulf %40, %28 : vector<6x16x16xf32>
    %42 = arith.addf %39, %41 : vector<6x16x16xf32>
    %43 = vector.extract_strided_slice %28 {offsets = [0, 0, 15], sizes = [6, 16, 1], strides = [1, 1, 1]} : vector<6x16x16xf32> to vector<6x16x1xf32>
    %44 = vector.extract_strided_slice %28 {offsets = [0, 0, 1], sizes = [6, 16, 15], strides = [1, 1, 1]} : vector<6x16x16xf32> to vector<6x16x15xf32>
    %45 = tpu.concatenate %44, %43 in 2 : vector<6x16x15xf32>, vector<6x16x1xf32> -> vector<6x16x16xf32>
    %cst_12 = arith.constant 2.500000e-01 : f32
    %46 = vector.broadcast %cst_12 : f32 to vector<6x16x16xf32>
    %47 = arith.mulf %46, %45 : vector<6x16x16xf32>
    %48 = arith.addf %42, %47 : vector<6x16x16xf32>
    %49 = vector.extract_strided_slice %28 {offsets = [0, 0, 15], sizes = [6, 16, 1], strides = [1, 1, 1]} : vector<6x16x16xf32> to vector<6x16x1xf32>
    %50 = vector.extract_strided_slice %28 {offsets = [0, 0, 2], sizes = [6, 16, 14], strides = [1, 1, 1]} : vector<6x16x16xf32> to vector<6x16x14xf32>
    %51 = tpu.concatenate %50, %49, %49 in 2 : vector<6x16x14xf32>, vector<6x16x1xf32>, vector<6x16x1xf32> -> vector<6x16x16xf32>
    %cst_13 = arith.constant 5.000000e-02 : f32
    %52 = vector.broadcast %cst_13 : f32 to vector<6x16x16xf32>
    %53 = arith.mulf %52, %51 : vector<6x16x16xf32>
    %54 = arith.addf %48, %53 : vector<6x16x16xf32>
    %55 = tpu.iota {dimensions = array<i32: 1>} : vector<6x16x16xi32>
    %56 = tpu.iota {dimensions = array<i32: 2>} : vector<6x16x16xi32>
    %c1_i32 = arith.constant 1 : i32
    %57 = vector.broadcast %c1_i32 : i32 to vector<6x16x16xi32>
    %58 = arith.andi %55, %57 : vector<6x16x16xi32>
    %c0_i32 = arith.constant 0 : i32
    %59 = vector.broadcast %c0_i32 : i32 to vector<6x16x16xi32>
    %60 = arith.cmpi eq, %58, %59 : vector<6x16x16xi32>
    %c1_i32_14 = arith.constant 1 : i32
    %61 = vector.broadcast %c1_i32_14 : i32 to vector<6x16x16xi32>
    %62 = arith.andi %56, %61 : vector<6x16x16xi32>
    %c0_i32_15 = arith.constant 0 : i32
    %63 = vector.broadcast %c0_i32_15 : i32 to vector<6x16x16xi32>
    %64 = arith.cmpi eq, %62, %63 : vector<6x16x16xi32>
    %65 = arith.andi %60, %64 : vector<6x16x16xi1>
    %cst_16 = arith.constant 4.000000e+00 : f32
    %cst_17 = arith.constant 0.000000e+00 : f32
    %66 = vector.broadcast %cst_16 : f32 to vector<6x16x16xf32>
    %67 = vector.broadcast %cst_17 : f32 to vector<6x16x16xf32>
    %68 = arith.select %65, %66, %67 : vector<6x16x16xi1>, vector<6x16x16xf32>
    %69 = arith.mulf %54, %68 : vector<6x16x16xf32>
    %70 = vector.extract_strided_slice %69 {offsets = [0, 0, 0], sizes = [6, 1, 16], strides = [1, 1, 1]} : vector<6x16x16xf32> to vector<6x1x16xf32>
    %71 = vector.extract_strided_slice %69 {offsets = [0, 0, 0], sizes = [6, 14, 16], strides = [1, 1, 1]} : vector<6x16x16xf32> to vector<6x14x16xf32>
    %72 = tpu.concatenate %70, %70, %71 in 1 : vector<6x1x16xf32>, vector<6x1x16xf32>, vector<6x14x16xf32> -> vector<6x16x16xf32>
    %cst_18 = arith.constant 5.000000e-02 : f32
    %73 = vector.broadcast %cst_18 : f32 to vector<6x16x16xf32>
    %74 = arith.mulf %73, %72 : vector<6x16x16xf32>
    %75 = vector.extract_strided_slice %69 {offsets = [0, 0, 0], sizes = [6, 1, 16], strides = [1, 1, 1]} : vector<6x16x16xf32> to vector<6x1x16xf32>
    %76 = vector.extract_strided_slice %69 {offsets = [0, 0, 0], sizes = [6, 15, 16], strides = [1, 1, 1]} : vector<6x16x16xf32> to vector<6x15x16xf32>
    %77 = tpu.concatenate %75, %76 in 1 : vector<6x1x16xf32>, vector<6x15x16xf32> -> vector<6x16x16xf32>
    %cst_19 = arith.constant 2.500000e-01 : f32
    %78 = vector.broadcast %cst_19 : f32 to vector<6x16x16xf32>
    %79 = arith.mulf %78, %77 : vector<6x16x16xf32>
    %80 = arith.addf %74, %79 : vector<6x16x16xf32>
    %cst_20 = arith.constant 4.000000e-01 : f32
    %81 = vector.broadcast %cst_20 : f32 to vector<6x16x16xf32>
    %82 = arith.mulf %81, %69 : vector<6x16x16xf32>
    %83 = arith.addf %80, %82 : vector<6x16x16xf32>
    %84 = vector.extract_strided_slice %69 {offsets = [0, 15, 0], sizes = [6, 1, 16], strides = [1, 1, 1]} : vector<6x16x16xf32> to vector<6x1x16xf32>
    %85 = vector.extract_strided_slice %69 {offsets = [0, 1, 0], sizes = [6, 15, 16], strides = [1, 1, 1]} : vector<6x16x16xf32> to vector<6x15x16xf32>
    %86 = tpu.concatenate %85, %84 in 1 : vector<6x15x16xf32>, vector<6x1x16xf32> -> vector<6x16x16xf32>
    %cst_21 = arith.constant 2.500000e-01 : f32
    %87 = vector.broadcast %cst_21 : f32 to vector<6x16x16xf32>
    %88 = arith.mulf %87, %86 : vector<6x16x16xf32>
    %89 = arith.addf %83, %88 : vector<6x16x16xf32>
    %90 = vector.extract_strided_slice %69 {offsets = [0, 15, 0], sizes = [6, 1, 16], strides = [1, 1, 1]} : vector<6x16x16xf32> to vector<6x1x16xf32>
    %91 = vector.extract_strided_slice %69 {offsets = [0, 2, 0], sizes = [6, 14, 16], strides = [1, 1, 1]} : vector<6x16x16xf32> to vector<6x14x16xf32>
    %92 = tpu.concatenate %91, %90, %90 in 1 : vector<6x14x16xf32>, vector<6x1x16xf32>, vector<6x1x16xf32> -> vector<6x16x16xf32>
    %cst_22 = arith.constant 5.000000e-02 : f32
    %93 = vector.broadcast %cst_22 : f32 to vector<6x16x16xf32>
    %94 = arith.mulf %93, %92 : vector<6x16x16xf32>
    %95 = arith.addf %89, %94 : vector<6x16x16xf32>
    %96 = vector.extract_strided_slice %95 {offsets = [0, 0, 0], sizes = [6, 16, 1], strides = [1, 1, 1]} : vector<6x16x16xf32> to vector<6x16x1xf32>
    %97 = vector.extract_strided_slice %95 {offsets = [0, 0, 0], sizes = [6, 16, 14], strides = [1, 1, 1]} : vector<6x16x16xf32> to vector<6x16x14xf32>
    %98 = tpu.concatenate %96, %96, %97 in 2 : vector<6x16x1xf32>, vector<6x16x1xf32>, vector<6x16x14xf32> -> vector<6x16x16xf32>
    %cst_23 = arith.constant 5.000000e-02 : f32
    %99 = vector.broadcast %cst_23 : f32 to vector<6x16x16xf32>
    %100 = arith.mulf %99, %98 : vector<6x16x16xf32>
    %101 = vector.extract_strided_slice %95 {offsets = [0, 0, 0], sizes = [6, 16, 1], strides = [1, 1, 1]} : vector<6x16x16xf32> to vector<6x16x1xf32>
    %102 = vector.extract_strided_slice %95 {offsets = [0, 0, 0], sizes = [6, 16, 15], strides = [1, 1, 1]} : vector<6x16x16xf32> to vector<6x16x15xf32>
    %103 = tpu.concatenate %101, %102 in 2 : vector<6x16x1xf32>, vector<6x16x15xf32> -> vector<6x16x16xf32>
    %cst_24 = arith.constant 2.500000e-01 : f32
    %104 = vector.broadcast %cst_24 : f32 to vector<6x16x16xf32>
    %105 = arith.mulf %104, %103 : vector<6x16x16xf32>
    %106 = arith.addf %100, %105 : vector<6x16x16xf32>
    %cst_25 = arith.constant 4.000000e-01 : f32
    %107 = vector.broadcast %cst_25 : f32 to vector<6x16x16xf32>
    %108 = arith.mulf %107, %95 : vector<6x16x16xf32>
    %109 = arith.addf %106, %108 : vector<6x16x16xf32>
    %110 = vector.extract_strided_slice %95 {offsets = [0, 0, 15], sizes = [6, 16, 1], strides = [1, 1, 1]} : vector<6x16x16xf32> to vector<6x16x1xf32>
    %111 = vector.extract_strided_slice %95 {offsets = [0, 0, 1], sizes = [6, 16, 15], strides = [1, 1, 1]} : vector<6x16x16xf32> to vector<6x16x15xf32>
    %112 = tpu.concatenate %111, %110 in 2 : vector<6x16x15xf32>, vector<6x16x1xf32> -> vector<6x16x16xf32>
    %cst_26 = arith.constant 2.500000e-01 : f32
    %113 = vector.broadcast %cst_26 : f32 to vector<6x16x16xf32>
    %114 = arith.mulf %113, %112 : vector<6x16x16xf32>
    %115 = arith.addf %109, %114 : vector<6x16x16xf32>
    %116 = vector.extract_strided_slice %95 {offsets = [0, 0, 15], sizes = [6, 16, 1], strides = [1, 1, 1]} : vector<6x16x16xf32> to vector<6x16x1xf32>
    %117 = vector.extract_strided_slice %95 {offsets = [0, 0, 2], sizes = [6, 16, 14], strides = [1, 1, 1]} : vector<6x16x16xf32> to vector<6x16x14xf32>
    %118 = tpu.concatenate %117, %116, %116 in 2 : vector<6x16x14xf32>, vector<6x16x1xf32>, vector<6x16x1xf32> -> vector<6x16x16xf32>
    %cst_27 = arith.constant 5.000000e-02 : f32
    %119 = vector.broadcast %cst_27 : f32 to vector<6x16x16xf32>
    %120 = arith.mulf %119, %118 : vector<6x16x16xf32>
    %121 = arith.addf %115, %120 : vector<6x16x16xf32>
    %122 = arith.subf %2, %121 : vector<6x16x16xf32>
    %123 = arith.mulf %122, %122 : vector<6x16x16xf32>
    %cst_28 = arith.constant 9.99999997E-7 : f32
    %124 = vector.broadcast %cst_28 : f32 to vector<6x16x16xf32>
    %125 = arith.addf %123, %124 : vector<6x16x16xf32>
    %126 = math.sqrt %125 : vector<6x16x16xf32>
    %127 = vector.shape_cast %126 : vector<6x16x16xf32> to vector<1x6x16x16xf32>
    %cst_29 = arith.constant dense<0.000000e+00> : vector<1xf32>
    %128 = vector.multi_reduction <add>, %127, %cst_29 [1, 2, 3] : vector<1x6x16x16xf32> to vector<1xf32>
    %129 = vector.shape_cast %128 : vector<1xf32> to vector<1x1x1x1xf32>
    %130 = vector.extract %129[0, 0, 0, 0] : f32 from vector<1x1x1x1xf32>
    %131 = vector.broadcast %130 : f32 to vector<1x1x1xf32>
    %c0_30 = arith.constant 0 : index
    %c0_31 = arith.constant 0 : index
    %c0_32 = arith.constant 0 : index
    %132 = vector.load %arg3[%c0_30, %c0_31, %c0_32] : memref<1x1x1xf32, #tpu.memory_space<vmem>>, vector<1x1x1xf32>
    tpu.vector_store %arg3[%c0_30, %c0_31, %c0_32], %131 {strides = array<i32>} : memref<1x1x1xf32, #tpu.memory_space<vmem>>, vector<1x1x1xf32>,
    return
  }
  func.func @transform_0(%arg0: i32) -> (i32, i32, i32) {
    %c0_i32 = arith.constant 0 : i32
    %c0_i32_0 = arith.constant 0 : i32
    %c0_i32_1 = arith.constant 0 : i32
    return %arg0, %c0_i32, %c0_i32_0 : i32, i32, i32
  }
  func.func @transform_1(%arg0: i32) -> (i32, i32, i32) {
    %c0_i32 = arith.constant 0 : i32
    %c0_i32_0 = arith.constant 0 : i32
    %c0_i32_1 = arith.constant 0 : i32
    return %arg0, %c0_i32, %c0_i32_0 : i32, i32, i32
  }
  func.func @transform_2(%arg0: i32) -> (i32, i32, i32) {
    %c0_i32 = arith.constant 0 : i32
    %c0_i32_0 = arith.constant 0 : i32
    %c0_i32_1 = arith.constant 0 : i32
    return %arg0, %c0_i32, %c0_i32_0 : i32, i32, i32
  }
}

</mosaic_0001>

<llo_original>
// kernel: tpu_custom_call.1
$region0: #{tpu_custom_call.1}
  #allocation0 [shape = 'u32[]', space=smem, size = 0x4, offset = 0x4, fixed_abs, tag = 'smem constant byte address 0x4 - core index']
  #allocation1 [shape = 'u32[144,128]{1,0:T(1,128)}', space=vmem, size = 0x12000, scoped, tag = 'internal scratch']
  %s0 = inlined_call_operand.hbm [shape: f32[6,16,16], index: 0, kind: input, shape index: {}]
  %s1 = inlined_call_operand.hbm [shape: f32[6,16,16], index: 1, kind: input, shape index: {}]
  %s2 = inlined_call_operand.hbm [shape: f32[1,1,1], index: 2, kind: output, shape index: {}]
  %s3 = sld [smem:[#allocation0]]
  $region26: #{tpu_custom_call.1} parent=0
    _
  %s5 = ssub.s32 1, %s3
  %s6 = scalar_select 0, %s5, %s3
  $region1: #{tpu_custom_call.1} parent=0
    #allocation2 [shape = 'u8[49152]{0}', space=vmem, size = 0xc000, scoped, tag = 'input window, operand 0, single buffered']
    #allocation3 [shape = 's32[1]{0}', space=sflag, size = 0x4, scoped, tag = 'scoped memory for tpu_custom_call.1']
    #allocation4 [shape = 's32[1]{0}', space=sflag, size = 0x4, scoped, tag = 'scoped memory for tpu_custom_call.1']
    #allocation5 [shape = 'u8[49152]{0}', space=vmem, size = 0xc000, scoped, tag = 'input window, operand 1, single buffered']
    #allocation6 [shape = 's32[1]{0}', space=sflag, size = 0x4, scoped, tag = 'scoped memory for tpu_custom_call.1']
    #allocation7 [shape = 'u8[512]{0}', space=vmem, size = 0x400, scoped, tag = 'output window, operand 0, single buffered']
    %7 = vsyncpa [#allocation3], 0
    %8 = vsyncpa [#allocation6], 0
    %9 = vsyncpa [#allocation4], 0
    // Predicated region
    $region2: #{tpu_custom_call.1} parent=1 // pred_check
      _
    $region3: #{tpu_custom_call.1} parent=1 // pred_check_branch
      %11 = sbr.rel (0) target = $region5
    $region4: #{tpu_custom_call.1} parent=1 // pred_region
      %s13 = ssub.s32 1536, 1536
      %14 = vsyncadd [#allocation3], %s13
      %s15 = sshll.u32 [#allocation2], 4
      %s16 = int_to_ptr.vmem [resolvable:$true] %s15
      %21 = dma.hbm_to_vmem [thread:$0]  %s0, 1536, %s16, [#allocation3], 128, 128, 8
    $region5: #{tpu_custom_call.1} parent=1 // pred_fallthru
      _
    // Predicated region
    $region6: #{tpu_custom_call.1} parent=1 // pred_check
      _
    $region7: #{tpu_custom_call.1} parent=1 // pred_check_branch
      %23 = sbr.rel (0) target = $region9
    $region8: #{tpu_custom_call.1} parent=1 // pred_region
      %s25 = ssub.s32 1536, 1536
      %26 = vsyncadd [#allocation6], %s25
      %s27 = sshll.u32 [#allocation5], 4
      %s28 = int_to_ptr.vmem [resolvable:$true] %s27
      %33 = dma.hbm_to_vmem [thread:$0]  %s1, 1536, %s28, [#allocation6], 128, 128, 8
    $region9: #{tpu_custom_call.1} parent=1 // pred_fallthru
      _
    // Predicated region
    $region10: #{tpu_custom_call.1} parent=1 // pred_check
      _
    $region11: #{tpu_custom_call.1} parent=1 // pred_check_branch
      %35 = sbr.rel (0) target = $region13
    $region12: #{tpu_custom_call.1} parent=1 // pred_region
      %36 = dma.done [#allocation3], 1536
    $region13: #{tpu_custom_call.1} parent=1 // pred_fallthru
      _
    // Predicated region
    $region14: #{tpu_custom_call.1} parent=1 // pred_check
      _
    $region15: #{tpu_custom_call.1} parent=1 // pred_check_branch
      %38 = sbr.rel (0) target = $region17
    $region16: #{tpu_custom_call.1} parent=1 // pred_region
      %39 = dma.done [#allocation6], 1536
    $region17: #{tpu_custom_call.1} parent=1 // pred_fallthru
      _
    %v40 = vld [vmem:[#allocation2] sm:$0xff]
    %v41 = vld [vmem:[#allocation2 + $0x8] sm:$0xff]
    %v42 = vld [vmem:[#allocation2 + $0x10] sm:$0xff]
    %v43 = vld [vmem:[#allocation2 + $0x18] sm:$0xff]
    %v44 = vld [vmem:[#allocation2 + $0x20] sm:$0xff]
    %v45 = vld [vmem:[#allocation2 + $0x28] sm:$0xff]
    %v46 = vld [vmem:[#allocation2 + $0x30] sm:$0xff]
    %v47 = vld [vmem:[#allocation2 + $0x38] sm:$0xff]
    %v48 = vld [vmem:[#allocation2 + $0x40] sm:$0xff]
    %v49 = vld [vmem:[#allocation2 + $0x48] sm:$0xff]
    %v50 = vld [vmem:[#allocation2 + $0x50] sm:$0xff]
    %v51 = vld [vmem:[#allocation2 + $0x58] sm:$0xff]
    %v52 = vld [vmem:[#allocation5] sm:$0xff]
    %v53 = vld [vmem:[#allocation5 + $0x8] sm:$0xff]
    %v54 = vld [vmem:[#allocation5 + $0x10] sm:$0xff]
    %v55 = vld [vmem:[#allocation5 + $0x18] sm:$0xff]
    %v56 = vld [vmem:[#allocation5 + $0x20] sm:$0xff]
    %v57 = vld [vmem:[#allocation5 + $0x28] sm:$0xff]
    %v58 = vld [vmem:[#allocation5 + $0x30] sm:$0xff]
    %v59 = vld [vmem:[#allocation5 + $0x38] sm:$0xff]
    %v60 = vld [vmem:[#allocation5 + $0x40] sm:$0xff]
    %v61 = vld [vmem:[#allocation5 + $0x48] sm:$0xff]
    %v62 = vld [vmem:[#allocation5 + $0x50] sm:$0xff]
    %v63 = vld [vmem:[#allocation5 + $0x58] sm:$0xff]
    %v64 = vsub.f32 %v40, %v52
    %v65 = vsub.f32 %v41, %v53
    %v66 = vsub.f32 %v42, %v54
    %v67 = vsub.f32 %v43, %v55
    %v68 = vsub.f32 %v44, %v56
    %v69 = vsub.f32 %v45, %v57
    %v70 = vsub.f32 %v46, %v58
    %v71 = vsub.f32 %v47, %v59
    %v72 = vsub.f32 %v48, %v60
    %v73 = vsub.f32 %v49, %v61
    %v74 = vsub.f32 %v50, %v62
    %v75 = vsub.f32 %v51, %v63
    %v82 = vrot.slane %v64, 7
    %v83 = vrot.slane %v66, 7
    %v84 = vrot.slane %v68, 7
    %v85 = vrot.slane %v70, 7
    %v86 = vrot.slane %v72, 7
    %v87 = vrot.slane %v74, 7
    %vm100 = vcmask 1041408
    %v101 = vrot.slane %v64, 6
    %v102 = vrot.slane %v65, 6
    %v103 = vsel %vm100, %v101, %v102
    %v104 = vrot.slane %v66, 6
    %v105 = vrot.slane %v67, 6
    %v106 = vsel %vm100, %v104, %v105
    %v107 = vrot.slane %v68, 6
    %v108 = vrot.slane %v69, 6
    %v109 = vsel %vm100, %v107, %v108
    %v110 = vrot.slane %v70, 6
    %v111 = vrot.slane %v71, 6
    %v112 = vsel %vm100, %v110, %v111
    %v113 = vrot.slane %v72, 6
    %v114 = vrot.slane %v73, 6
    %v115 = vsel %vm100, %v113, %v114
    %v116 = vrot.slane %v74, 6
    %v117 = vrot.slane %v75, 6
    %v118 = vsel %vm100, %v116, %v117
    %vm131 = vcmask 1040384
    %v132 = vsel %vm131, %v64, %v82
    %v133 = vsel %vm131, %v66, %v83
    %v134 = vsel %vm131, %v68, %v84
    %v135 = vsel %vm131, %v70, %v85
    %v136 = vsel %vm131, %v72, %v86
    %v137 = vsel %vm131, %v74, %v87
    %v138 = vsel %vm100, %v132, %v101
    %v139 = vsel %vm100, %v133, %v104
    %v140 = vsel %vm100, %v134, %v107
    %v141 = vsel %vm100, %v135, %v110
    %v142 = vsel %vm100, %v136, %v113
    %v143 = vsel %vm100, %v137, %v116
    %v144 = vmul.f32 %v138, 0.05
    %v145 = vmul.f32 %v103, 0.05
    %v146 = vmul.f32 %v139, 0.05
    %v147 = vmul.f32 %v106, 0.05
    %v148 = vmul.f32 %v140, 0.05
    %v149 = vmul.f32 %v109, 0.05
    %v150 = vmul.f32 %v141, 0.05
    %v151 = vmul.f32 %v112, 0.05
    %v152 = vmul.f32 %v142, 0.05
    %v153 = vmul.f32 %v115, 0.05
    %v154 = vmul.f32 %v143, 0.05
    %v155 = vmul.f32 %v118, 0.05
    %v156 = vrot.slane %v65, 7
    %v157 = vsel %vm131, %v82, %v156
    %v158 = vrot.slane %v67, 7
    %v159 = vsel %vm131, %v83, %v158
    %v160 = vrot.slane %v69, 7
    %v161 = vsel %vm131, %v84, %v160
    %v162 = vrot.slane %v71, 7
    %v163 = vsel %vm131, %v85, %v162
    %v164 = vrot.slane %v73, 7
    %v165 = vsel %vm131, %v86, %v164
    %v166 = vrot.slane %v75, 7
    %v167 = vsel %vm131, %v87, %v166
    %v174 = vmul.f32 %v132, 0.25
    %v175 = vmul.f32 %v157, 0.25
    %v176 = vmul.f32 %v133, 0.25
    %v177 = vmul.f32 %v159, 0.25
    %v178 = vmul.f32 %v134, 0.25
    %v179 = vmul.f32 %v161, 0.25
    %v180 = vmul.f32 %v135, 0.25
    %v181 = vmul.f32 %v163, 0.25
    %v182 = vmul.f32 %v136, 0.25
    %v183 = vmul.f32 %v165, 0.25
    %v184 = vmul.f32 %v137, 0.25
    %v185 = vmul.f32 %v167, 0.25
    %v186 = vadd.f32 %v144, %v174
    %v187 = vadd.f32 %v145, %v175
    %v188 = vadd.f32 %v146, %v176
    %v189 = vadd.f32 %v147, %v177
    %v190 = vadd.f32 %v148, %v178
    %v191 = vadd.f32 %v149, %v179
    %v192 = vadd.f32 %v150, %v180
    %v193 = vadd.f32 %v151, %v181
    %v194 = vadd.f32 %v152, %v182
    %v195 = vadd.f32 %v153, %v183
    %v196 = vadd.f32 %v154, %v184
    %v197 = vadd.f32 %v155, %v185
    %v198 = vmul.f32 %v64, 0.4
    %v199 = vmul.f32 %v65, 0.4
    %v200 = vmul.f32 %v66, 0.4
    %v201 = vmul.f32 %v67, 0.4
    %v202 = vmul.f32 %v68, 0.4
    %v203 = vmul.f32 %v69, 0.4
    %v204 = vmul.f32 %v70, 0.4
    %v205 = vmul.f32 %v71, 0.4
    %v206 = vmul.f32 %v72, 0.4
    %v207 = vmul.f32 %v73, 0.4
    %v208 = vmul.f32 %v74, 0.4
    %v209 = vmul.f32 %v75, 0.4
    %v210 = vadd.f32 %v186, %v198
    %v211 = vadd.f32 %v187, %v199
    %v212 = vadd.f32 %v188, %v200
    %v213 = vadd.f32 %v189, %v201
    %v214 = vadd.f32 %v190, %v202
    %v215 = vadd.f32 %v191, %v203
    %v216 = vadd.f32 %v192, %v204
    %v217 = vadd.f32 %v193, %v205
    %v218 = vadd.f32 %v194, %v206
    %v219 = vadd.f32 %v195, %v207
    %v220 = vadd.f32 %v196, %v208
    %v221 = vadd.f32 %v197, %v209
    %vm222 = vcmask 1046528
    %v223 = vrot.slane %v64, 1
    %v224 = vrot.slane %v65, 1
    %v225 = vsel %vm222, %v223, %v224
    %v226 = vrot.slane %v66, 1
    %v227 = vrot.slane %v67, 1
    %v228 = vsel %vm222, %v226, %v227
    %v229 = vrot.slane %v68, 1
    %v230 = vrot.slane %v69, 1
    %v231 = vsel %vm222, %v229, %v230
    %v232 = vrot.slane %v70, 1
    %v233 = vrot.slane %v71, 1
    %v234 = vsel %vm222, %v232, %v233
    %v235 = vrot.slane %v72, 1
    %v236 = vrot.slane %v73, 1
    %v237 = vsel %vm222, %v235, %v236
    %v238 = vrot.slane %v74, 1
    %v239 = vrot.slane %v75, 1
    %v240 = vsel %vm222, %v238, %v239
    %v253 = vsel %vm222, %v224, %v65
    %v254 = vsel %vm222, %v227, %v67
    %v255 = vsel %vm222, %v230, %v69
    %v256 = vsel %vm222, %v233, %v71
    %v257 = vsel %vm222, %v236, %v73
    %v258 = vsel %vm222, %v239, %v75
    %v259 = vmul.f32 %v225, 0.25
    %v260 = vmul.f32 %v253, 0.25
    %v261 = vmul.f32 %v228, 0.25
    %v262 = vmul.f32 %v254, 0.25
    %v263 = vmul.f32 %v231, 0.25
    %v264 = vmul.f32 %v255, 0.25
    %v265 = vmul.f32 %v234, 0.25
    %v266 = vmul.f32 %v256, 0.25
    %v267 = vmul.f32 %v237, 0.25
    %v268 = vmul.f32 %v257, 0.25
    %v269 = vmul.f32 %v240, 0.25
    %v270 = vmul.f32 %v258, 0.25
    %v271 = vadd.f32 %v210, %v259
    %v272 = vadd.f32 %v211, %v260
    %v273 = vadd.f32 %v212, %v261
    %v274 = vadd.f32 %v213, %v262
    %v275 = vadd.f32 %v214, %v263
    %v276 = vadd.f32 %v215, %v264
    %v277 = vadd.f32 %v216, %v265
    %v278 = vadd.f32 %v217, %v266
    %v279 = vadd.f32 %v218, %v267
    %v280 = vadd.f32 %v219, %v268
    %v281 = vadd.f32 %v220, %v269
    %v282 = vadd.f32 %v221, %v270
    %vm283 = vcmask 1045504
    %v284 = vrot.slane %v64, 2
    %v285 = vrot.slane %v65, 2
    %v286 = vsel %vm283, %v284, %v285
    %v287 = vrot.slane %v66, 2
    %v288 = vrot.slane %v67, 2
    %v289 = vsel %vm283, %v287, %v288
    %v290 = vrot.slane %v68, 2
    %v291 = vrot.slane %v69, 2
    %v292 = vsel %vm283, %v290, %v291
    %v293 = vrot.slane %v70, 2
    %v294 = vrot.slane %v71, 2
    %v295 = vsel %vm283, %v293, %v294
    %v296 = vrot.slane %v72, 2
    %v297 = vrot.slane %v73, 2
    %v298 = vsel %vm283, %v296, %v297
    %v299 = vrot.slane %v74, 2
    %v300 = vrot.slane %v75, 2
    %v301 = vsel %vm283, %v299, %v300
    %v314 = vsel %vm283, %v285, %v224
    %v315 = vsel %vm283, %v288, %v227
    %v316 = vsel %vm283, %v291, %v230
    %v317 = vsel %vm283, %v294, %v233
    %v318 = vsel %vm283, %v297, %v236
    %v319 = vsel %vm283, %v300, %v239
    %v320 = vsel %vm222, %v314, %v65
    %v321 = vsel %vm222, %v315, %v67
    %v322 = vsel %vm222, %v316, %v69
    %v323 = vsel %vm222, %v317, %v71
    %v324 = vsel %vm222, %v318, %v73
    %v325 = vsel %vm222, %v319, %v75
    %v326 = vmul.f32 %v286, 0.05
    %v327 = vmul.f32 %v320, 0.05
    %v328 = vmul.f32 %v289, 0.05
    %v329 = vmul.f32 %v321, 0.05
    %v330 = vmul.f32 %v292, 0.05
    %v331 = vmul.f32 %v322, 0.05
    %v332 = vmul.f32 %v295, 0.05
    %v333 = vmul.f32 %v323, 0.05
    %v334 = vmul.f32 %v298, 0.05
    %v335 = vmul.f32 %v324, 0.05
    %v336 = vmul.f32 %v301, 0.05
    %v337 = vmul.f32 %v325, 0.05
    %v338 = vadd.f32 %v271, %v326
    %v339 = vadd.f32 %v272, %v327
    %v340 = vadd.f32 %v273, %v328
    %v341 = vadd.f32 %v274, %v329
    %v342 = vadd.f32 %v275, %v330
    %v343 = vadd.f32 %v276, %v331
    %v344 = vadd.f32 %v277, %v332
    %v345 = vadd.f32 %v278, %v333
    %v346 = vadd.f32 %v279, %v334
    %v347 = vadd.f32 %v280, %v335
    %v348 = vadd.f32 %v281, %v336
    %v349 = vadd.f32 %v282, %v337
    %362 = vrot.lane.b32.xlu0 %v338, 1
    %v363 = vpop.permute.xlu0 %362
    %364 = vrot.lane.b32.xlu0 %v339, 1
    %v365 = vpop.permute.xlu0 %364
    %366 = vrot.lane.b32.xlu0 %v340, 1
    %v367 = vpop.permute.xlu0 %366
    %368 = vrot.lane.b32.xlu0 %v341, 1
    %v369 = vpop.permute.xlu0 %368
    %370 = vrot.lane.b32.xlu0 %v342, 1
    %v371 = vpop.permute.xlu0 %370
    %372 = vrot.lane.b32.xlu0 %v343, 1
    %v373 = vpop.permute.xlu0 %372
    %374 = vrot.lane.b32.xlu0 %v344, 1
    %v375 = vpop.permute.xlu0 %374
    %376 = vrot.lane.b32.xlu0 %v345, 1
    %v377 = vpop.permute.xlu0 %376
    %378 = vrot.lane.b32.xlu0 %v346, 1
    %v379 = vpop.permute.xlu0 %378
    %380 = vrot.lane.b32.xlu0 %v347, 1
    %v381 = vpop.permute.xlu0 %380
    %382 = vrot.lane.b32.xlu0 %v348, 1
    %v383 = vpop.permute.xlu0 %382
    %384 = vrot.lane.b32.xlu0 %v349, 1
    %v385 = vpop.permute.xlu0 %384
    %398 = vrot.lane.b32.xlu0 %v338, 2
    %v399 = vpop.permute.xlu0 %398
    %400 = vrot.lane.b32.xlu0 %v339, 2
    %v401 = vpop.permute.xlu0 %400
    %402 = vrot.lane.b32.xlu0 %v340, 2
    %v403 = vpop.permute.xlu0 %402
    %404 = vrot.lane.b32.xlu0 %v341, 2
    %v405 = vpop.permute.xlu0 %404
    %406 = vrot.lane.b32.xlu0 %v342, 2
    %v407 = vpop.permute.xlu0 %406
    %408 = vrot.lane.b32.xlu0 %v343, 2
    %v409 = vpop.permute.xlu0 %408
    %410 = vrot.lane.b32.xlu0 %v344, 2
    %v411 = vpop.permute.xlu0 %410
    %412 = vrot.lane.b32.xlu0 %v345, 2
    %v413 = vpop.permute.xlu0 %412
    %414 = vrot.lane.b32.xlu0 %v346, 2
    %v415 = vpop.permute.xlu0 %414
    %416 = vrot.lane.b32.xlu0 %v347, 2
    %v417 = vpop.permute.xlu0 %416
    %418 = vrot.lane.b32.xlu0 %v348, 2
    %v419 = vpop.permute.xlu0 %418
    %420 = vrot.lane.b32.xlu0 %v349, 2
    %v421 = vpop.permute.xlu0 %420
    %vm434 = vcmask 7168
    %v435 = vsel %vm434, %v338, %v363
    %v436 = vsel %vm434, %v339, %v365
    %v437 = vsel %vm434, %v340, %v367
    %v438 = vsel %vm434, %v341, %v369
    %v439 = vsel %vm434, %v342, %v371
    %v440 = vsel %vm434, %v343, %v373
    %v441 = vsel %vm434, %v344, %v375
    %v442 = vsel %vm434, %v345, %v377
    %v443 = vsel %vm434, %v346, %v379
    %v444 = vsel %vm434, %v347, %v381
    %v445 = vsel %vm434, %v348, %v383
    %v446 = vsel %vm434, %v349, %v385
    %vm447 = vcmask 15360
    %v448 = vsel %vm447, %v435, %v399
    %v449 = vsel %vm447, %v436, %v401
    %v450 = vsel %vm447, %v437, %v403
    %v451 = vsel %vm447, %v438, %v405
    %v452 = vsel %vm447, %v439, %v407
    %v453 = vsel %vm447, %v440, %v409
    %v454 = vsel %vm447, %v441, %v411
    %v455 = vsel %vm447, %v442, %v413
    %v456 = vsel %vm447, %v443, %v415
    %v457 = vsel %vm447, %v444, %v417
    %v458 = vsel %vm447, %v445, %v419
    %v459 = vsel %vm447, %v446, %v421
    %v460 = vmul.f32 %v448, 0.05
    %v461 = vmul.f32 %v449, 0.05
    %v462 = vmul.f32 %v450, 0.05
    %v463 = vmul.f32 %v451, 0.05
    %v464 = vmul.f32 %v452, 0.05
    %v465 = vmul.f32 %v453, 0.05
    %v466 = vmul.f32 %v454, 0.05
    %v467 = vmul.f32 %v455, 0.05
    %v468 = vmul.f32 %v456, 0.05
    %v469 = vmul.f32 %v457, 0.05
    %v470 = vmul.f32 %v458, 0.05
    %v471 = vmul.f32 %v459, 0.05
    %v472 = vmul.f32 %v435, 0.25
    %v473 = vmul.f32 %v436, 0.25
    %v474 = vmul.f32 %v437, 0.25
    %v475 = vmul.f32 %v438, 0.25
    %v476 = vmul.f32 %v439, 0.25
    %v477 = vmul.f32 %v440, 0.25
    %v478 = vmul.f32 %v441, 0.25
    %v479 = vmul.f32 %v442, 0.25
    %v480 = vmul.f32 %v443, 0.25
    %v481 = vmul.f32 %v444, 0.25
    %v482 = vmul.f32 %v445, 0.25
    %v483 = vmul.f32 %v446, 0.25
    %v484 = vadd.f32 %v460, %v472
    %v485 = vadd.f32 %v461, %v473
    %v486 = vadd.f32 %v462, %v474
    %v487 = vadd.f32 %v463, %v475
    %v488 = vadd.f32 %v464, %v476
    %v489 = vadd.f32 %v465, %v477
    %v490 = vadd.f32 %v466, %v478
    %v491 = vadd.f32 %v467, %v479
    %v492 = vadd.f32 %v468, %v480
    %v493 = vadd.f32 %v469, %v481
    %v494 = vadd.f32 %v470, %v482
    %v495 = vadd.f32 %v471, %v483
    %v496 = vmul.f32 %v338, 0.4
    %v497 = vmul.f32 %v339, 0.4
    %v498 = vmul.f32 %v340, 0.4
    %v499 = vmul.f32 %v341, 0.4
    %v500 = vmul.f32 %v342, 0.4
    %v501 = vmul.f32 %v343, 0.4
    %v502 = vmul.f32 %v344, 0.4
    %v503 = vmul.f32 %v345, 0.4
    %v504 = vmul.f32 %v346, 0.4
    %v505 = vmul.f32 %v347, 0.4
    %v506 = vmul.f32 %v348, 0.4
    %v507 = vmul.f32 %v349, 0.4
    %v508 = vadd.f32 %v484, %v496
    %v509 = vadd.f32 %v485, %v497
    %v510 = vadd.f32 %v486, %v498
    %v511 = vadd.f32 %v487, %v499
    %v512 = vadd.f32 %v488, %v500
    %v513 = vadd.f32 %v489, %v501
    %v514 = vadd.f32 %v490, %v502
    %v515 = vadd.f32 %v491, %v503
    %v516 = vadd.f32 %v492, %v504
    %v517 = vadd.f32 %v493, %v505
    %v518 = vadd.f32 %v494, %v506
    %v519 = vadd.f32 %v495, %v507
    %520 = vrot.lane.b32.xlu0 %v338, 127
    %v521 = vpop.permute.xlu0 %520
    %522 = vrot.lane.b32.xlu0 %v339, 127
    %v523 = vpop.permute.xlu0 %522
    %524 = vrot.lane.b32.xlu0 %v340, 127
    %v525 = vpop.permute.xlu0 %524
    %526 = vrot.lane.b32.xlu0 %v341, 127
    %v527 = vpop.permute.xlu0 %526
    %528 = vrot.lane.b32.xlu0 %v342, 127
    %v529 = vpop.permute.xlu0 %528
    %530 = vrot.lane.b32.xlu0 %v343, 127
    %v531 = vpop.permute.xlu0 %530
    %532 = vrot.lane.b32.xlu0 %v344, 127
    %v533 = vpop.permute.xlu0 %532
    %534 = vrot.lane.b32.xlu0 %v345, 127
    %v535 = vpop.permute.xlu0 %534
    %536 = vrot.lane.b32.xlu0 %v346, 127
    %v537 = vpop.permute.xlu0 %536
    %538 = vrot.lane.b32.xlu0 %v347, 127
    %v539 = vpop.permute.xlu0 %538
    %540 = vrot.lane.b32.xlu0 %v348, 127
    %v541 = vpop.permute.xlu0 %540
    %542 = vrot.lane.b32.xlu0 %v349, 127
    %v543 = vpop.permute.xlu0 %542
    %vm556 = vcmask 121856
    %v557 = vsel %vm556, %v521, %v338
    %v558 = vsel %vm556, %v523, %v339
    %v559 = vsel %vm556, %v525, %v340
    %v560 = vsel %vm556, %v527, %v341
    %v561 = vsel %vm556, %v529, %v342
    %v562 = vsel %vm556, %v531, %v343
    %v563 = vsel %vm556, %v533, %v344
    %v564 = vsel %vm556, %v535, %v345
    %v565 = vsel %vm556, %v537, %v346
    %v566 = vsel %vm556, %v539, %v347
    %v567 = vsel %vm556, %v541, %v348
    %v568 = vsel %vm556, %v543, %v349
    %v569 = vmul.f32 %v557, 0.25
    %v570 = vmul.f32 %v558, 0.25
    %v571 = vmul.f32 %v559, 0.25
    %v572 = vmul.f32 %v560, 0.25
    %v573 = vmul.f32 %v561, 0.25
    %v574 = vmul.f32 %v562, 0.25
    %v575 = vmul.f32 %v563, 0.25
    %v576 = vmul.f32 %v564, 0.25
    %v577 = vmul.f32 %v565, 0.25
    %v578 = vmul.f32 %v566, 0.25
    %v579 = vmul.f32 %v567, 0.25
    %v580 = vmul.f32 %v568, 0.25
    %v581 = vadd.f32 %v508, %v569
    %v582 = vadd.f32 %v509, %v570
    %v583 = vadd.f32 %v510, %v571
    %v584 = vadd.f32 %v511, %v572
    %v585 = vadd.f32 %v512, %v573
    %v586 = vadd.f32 %v513, %v574
    %v587 = vadd.f32 %v514, %v575
    %v588 = vadd.f32 %v515, %v576
    %v589 = vadd.f32 %v516, %v577
    %v590 = vadd.f32 %v517, %v578
    %v591 = vadd.f32 %v518, %v579
    %v592 = vadd.f32 %v519, %v580
    %593 = vrot.lane.b32.xlu0 %v338, 126
    %v594 = vpop.permute.xlu0 %593
    %595 = vrot.lane.b32.xlu0 %v339, 126
    %v596 = vpop.permute.xlu0 %595
    %597 = vrot.lane.b32.xlu0 %v340, 126
    %v598 = vpop.permute.xlu0 %597
    %599 = vrot.lane.b32.xlu0 %v341, 126
    %v600 = vpop.permute.xlu0 %599
    %601 = vrot.lane.b32.xlu0 %v342, 126
    %v602 = vpop.permute.xlu0 %601
    %603 = vrot.lane.b32.xlu0 %v343, 126
    %v604 = vpop.permute.xlu0 %603
    %605 = vrot.lane.b32.xlu0 %v344, 126
    %v606 = vpop.permute.xlu0 %605
    %607 = vrot.lane.b32.xlu0 %v345, 126
    %v608 = vpop.permute.xlu0 %607
    %609 = vrot.lane.b32.xlu0 %v346, 126
    %v610 = vpop.permute.xlu0 %609
    %611 = vrot.lane.b32.xlu0 %v347, 126
    %v612 = vpop.permute.xlu0 %611
    %613 = vrot.lane.b32.xlu0 %v348, 126
    %v614 = vpop.permute.xlu0 %613
    %615 = vrot.lane.b32.xlu0 %v349, 126
    %v616 = vpop.permute.xlu0 %615
    %vm629 = vcmask 113664
    %v630 = vsel %vm629, %v594, %v521
    %v631 = vsel %vm629, %v596, %v523
    %v632 = vsel %vm629, %v598, %v525
    %v633 = vsel %vm629, %v600, %v527
    %v634 = vsel %vm629, %v602, %v529
    %v635 = vsel %vm629, %v604, %v531
    %v636 = vsel %vm629, %v606, %v533
    %v637 = vsel %vm629, %v608, %v535
    %v638 = vsel %vm629, %v610, %v537
    %v639 = vsel %vm629, %v612, %v539
    %v640 = vsel %vm629, %v614, %v541
    %v641 = vsel %vm629, %v616, %v543
    %v642 = vsel %vm556, %v630, %v338
    %v643 = vsel %vm556, %v631, %v339
    %v644 = vsel %vm556, %v632, %v340
    %v645 = vsel %vm556, %v633, %v341
    %v646 = vsel %vm556, %v634, %v342
    %v647 = vsel %vm556, %v635, %v343
    %v648 = vsel %vm556, %v636, %v344
    %v649 = vsel %vm556, %v637, %v345
    %v650 = vsel %vm556, %v638, %v346
    %v651 = vsel %vm556, %v639, %v347
    %v652 = vsel %vm556, %v640, %v348
    %v653 = vsel %vm556, %v641, %v349
    %v654 = vmul.f32 %v642, 0.05
    %v655 = vmul.f32 %v643, 0.05
    %v656 = vmul.f32 %v644, 0.05
    %v657 = vmul.f32 %v645, 0.05
    %v658 = vmul.f32 %v646, 0.05
    %v659 = vmul.f32 %v647, 0.05
    %v660 = vmul.f32 %v648, 0.05
    %v661 = vmul.f32 %v649, 0.05
    %v662 = vmul.f32 %v650, 0.05
    %v663 = vmul.f32 %v651, 0.05
    %v664 = vmul.f32 %v652, 0.05
    %v665 = vmul.f32 %v653, 0.05
    %v666 = vadd.f32 %v581, %v654
    %v667 = vadd.f32 %v582, %v655
    %v668 = vadd.f32 %v583, %v656
    %v669 = vadd.f32 %v584, %v657
    %v670 = vadd.f32 %v585, %v658
    %v671 = vadd.f32 %v586, %v659
    %v672 = vadd.f32 %v587, %v660
    %v673 = vadd.f32 %v588, %v661
    %v674 = vadd.f32 %v589, %v662
    %v675 = vadd.f32 %v590, %v663
    %v676 = vadd.f32 %v591, %v664
    %v677 = vadd.f32 %v592, %v665
    %v678 = vlaneseq
    %v679 = vshrl.u32 %v678, 7
    %v680 = vadd.s32 %v679, 8
    %v681 = vlaneseq
    %v682 = vand.u32 %v681, 127
    %v683 = vand.u32 %v679, 1
    %v684 = vand.u32 %v680, 1
    %vm685 = vcmp.eq.s32.totalorder %v683, 0
    %vm686 = vcmp.eq.s32.totalorder %v684, 0
    %v687 = vand.u32 %v682, 1
    %vm688 = vcmp.eq.s32.totalorder %v687, 0
    %vm689 = vmand %vm685, %vm688
    %vm690 = vmand %vm686, %vm688
    %v691 = vsel %vm689, 4.0, 0.0
    %v692 = vsel %vm690, 4.0, 0.0
    %v693 = vmul.f32 %v666, %v691
    %v694 = vmul.f32 %v667, %v692
    %v695 = vmul.f32 %v668, %v691
    %v696 = vmul.f32 %v669, %v692
    %v697 = vmul.f32 %v670, %v691
    %v698 = vmul.f32 %v671, %v692
    %v699 = vmul.f32 %v672, %v691
    %v700 = vmul.f32 %v673, %v692
    %v701 = vmul.f32 %v674, %v691
    %v702 = vmul.f32 %v675, %v692
    %v703 = vmul.f32 %v676, %v691
    %v704 = vmul.f32 %v677, %v692
    %v711 = vrot.slane %v693, 7
    %v712 = vrot.slane %v695, 7
    %v713 = vrot.slane %v697, 7
    %v714 = vrot.slane %v699, 7
    %v715 = vrot.slane %v701, 7
    %v716 = vrot.slane %v703, 7
    %v729 = vrot.slane %v693, 6
    %v730 = vrot.slane %v694, 6
    %v731 = vsel %vm100, %v729, %v730
    %v732 = vrot.slane %v695, 6
    %v733 = vrot.slane %v696, 6
    %v734 = vsel %vm100, %v732, %v733
    %v735 = vrot.slane %v697, 6
    %v736 = vrot.slane %v698, 6
    %v737 = vsel %vm100, %v735, %v736
    %v738 = vrot.slane %v699, 6
    %v739 = vrot.slane %v700, 6
    %v740 = vsel %vm100, %v738, %v739
    %v741 = vrot.slane %v701, 6
    %v742 = vrot.slane %v702, 6
    %v743 = vsel %vm100, %v741, %v742
    %v744 = vrot.slane %v703, 6
    %v745 = vrot.slane %v704, 6
    %v746 = vsel %vm100, %v744, %v745
    %v759 = vsel %vm131, %v693, %v711
    %v760 = vsel %vm131, %v695, %v712
    %v761 = vsel %vm131, %v697, %v713
    %v762 = vsel %vm131, %v699, %v714
    %v763 = vsel %vm131, %v701, %v715
    %v764 = vsel %vm131, %v703, %v716
    %v765 = vsel %vm100, %v759, %v729
    %v766 = vsel %vm100, %v760, %v732
    %v767 = vsel %vm100, %v761, %v735
    %v768 = vsel %vm100, %v762, %v738
    %v769 = vsel %vm100, %v763, %v741
    %v770 = vsel %vm100, %v764, %v744
    %v771 = vmul.f32 %v765, 0.05
    %v772 = vmul.f32 %v731, 0.05
    %v773 = vmul.f32 %v766, 0.05
    %v774 = vmul.f32 %v734, 0.05
    %v775 = vmul.f32 %v767, 0.05
    %v776 = vmul.f32 %v737, 0.05
    %v777 = vmul.f32 %v768, 0.05
    %v778 = vmul.f32 %v740, 0.05
    %v779 = vmul.f32 %v769, 0.05
    %v780 = vmul.f32 %v743, 0.05
    %v781 = vmul.f32 %v770, 0.05
    %v782 = vmul.f32 %v746, 0.05
    %v783 = vrot.slane %v694, 7
    %v784 = vsel %vm131, %v711, %v783
    %v785 = vrot.slane %v696, 7
    %v786 = vsel %vm131, %v712, %v785
    %v787 = vrot.slane %v698, 7
    %v788 = vsel %vm131, %v713, %v787
    %v789 = vrot.slane %v700, 7
    %v790 = vsel %vm131, %v714, %v789
    %v791 = vrot.slane %v702, 7
    %v792 = vsel %vm131, %v715, %v791
    %v793 = vrot.slane %v704, 7
    %v794 = vsel %vm131, %v716, %v793
    %v801 = vmul.f32 %v759, 0.25
    %v802 = vmul.f32 %v784, 0.25
    %v803 = vmul.f32 %v760, 0.25
    %v804 = vmul.f32 %v786, 0.25
    %v805 = vmul.f32 %v761, 0.25
    %v806 = vmul.f32 %v788, 0.25
    %v807 = vmul.f32 %v762, 0.25
    %v808 = vmul.f32 %v790, 0.25
    %v809 = vmul.f32 %v763, 0.25
    %v810 = vmul.f32 %v792, 0.25
    %v811 = vmul.f32 %v764, 0.25
    %v812 = vmul.f32 %v794, 0.25
    %v813 = vadd.f32 %v771, %v801
    %v814 = vadd.f32 %v772, %v802
    %v815 = vadd.f32 %v773, %v803
    %v816 = vadd.f32 %v774, %v804
    %v817 = vadd.f32 %v775, %v805
    %v818 = vadd.f32 %v776, %v806
    %v819 = vadd.f32 %v777, %v807
    %v820 = vadd.f32 %v778, %v808
    %v821 = vadd.f32 %v779, %v809
    %v822 = vadd.f32 %v780, %v810
    %v823 = vadd.f32 %v781, %v811
    %v824 = vadd.f32 %v782, %v812
    %v825 = vmul.f32 %v693, 0.4
    %v826 = vmul.f32 %v694, 0.4
    %v827 = vmul.f32 %v695, 0.4
    %v828 = vmul.f32 %v696, 0.4
    %v829 = vmul.f32 %v697, 0.4
    %v830 = vmul.f32 %v698, 0.4
    %v831 = vmul.f32 %v699, 0.4
    %v832 = vmul.f32 %v700, 0.4
    %v833 = vmul.f32 %v701, 0.4
    %v834 = vmul.f32 %v702, 0.4
    %v835 = vmul.f32 %v703, 0.4
    %v836 = vmul.f32 %v704, 0.4
    %v837 = vadd.f32 %v813, %v825
    %v838 = vadd.f32 %v814, %v826
    %v839 = vadd.f32 %v815, %v827
    %v840 = vadd.f32 %v816, %v828
    %v841 = vadd.f32 %v817, %v829
    %v842 = vadd.f32 %v818, %v830
    %v843 = vadd.f32 %v819, %v831
    %v844 = vadd.f32 %v820, %v832
    %v845 = vadd.f32 %v821, %v833
    %v846 = vadd.f32 %v822, %v834
    %v847 = vadd.f32 %v823, %v835
    %v848 = vadd.f32 %v824, %v836
    %v849 = vrot.slane %v693, 1
    %v850 = vrot.slane %v694, 1
    %v851 = vsel %vm222, %v849, %v850
    %v852 = vrot.slane %v695, 1
    %v853 = vrot.slane %v696, 1
    %v854 = vsel %vm222, %v852, %v853
    %v855 = vrot.slane %v697, 1
    %v856 = vrot.slane %v698, 1
    %v857 = vsel %vm222, %v855, %v856
    %v858 = vrot.slane %v699, 1
    %v859 = vrot.slane %v700, 1
    %v860 = vsel %vm222, %v858, %v859
    %v861 = vrot.slane %v701, 1
    %v862 = vrot.slane %v702, 1
    %v863 = vsel %vm222, %v861, %v862
    %v864 = vrot.slane %v703, 1
    %v865 = vrot.slane %v704, 1
    %v866 = vsel %vm222, %v864, %v865
    %v879 = vsel %vm222, %v850, %v694
    %v880 = vsel %vm222, %v853, %v696
    %v881 = vsel %vm222, %v856, %v698
    %v882 = vsel %vm222, %v859, %v700
    %v883 = vsel %vm222, %v862, %v702
    %v884 = vsel %vm222, %v865, %v704
    %v885 = vmul.f32 %v851, 0.25
    %v886 = vmul.f32 %v879, 0.25
    %v887 = vmul.f32 %v854, 0.25
    %v888 = vmul.f32 %v880, 0.25
    %v889 = vmul.f32 %v857, 0.25
    %v890 = vmul.f32 %v881, 0.25
    %v891 = vmul.f32 %v860, 0.25
    %v892 = vmul.f32 %v882, 0.25
    %v893 = vmul.f32 %v863, 0.25
    %v894 = vmul.f32 %v883, 0.25
    %v895 = vmul.f32 %v866, 0.25
    %v896 = vmul.f32 %v884, 0.25
    %v897 = vadd.f32 %v837, %v885
    %v898 = vadd.f32 %v838, %v886
    %v899 = vadd.f32 %v839, %v887
    %v900 = vadd.f32 %v840, %v888
    %v901 = vadd.f32 %v841, %v889
    %v902 = vadd.f32 %v842, %v890
    %v903 = vadd.f32 %v843, %v891
    %v904 = vadd.f32 %v844, %v892
    %v905 = vadd.f32 %v845, %v893
    %v906 = vadd.f32 %v846, %v894
    %v907 = vadd.f32 %v847, %v895
    %v908 = vadd.f32 %v848, %v896
    %v909 = vrot.slane %v693, 2
    %v910 = vrot.slane %v694, 2
    %v911 = vsel %vm283, %v909, %v910
    %v912 = vrot.slane %v695, 2
    %v913 = vrot.slane %v696, 2
    %v914 = vsel %vm283, %v912, %v913
    %v915 = vrot.slane %v697, 2
    %v916 = vrot.slane %v698, 2
    %v917 = vsel %vm283, %v915, %v916
    %v918 = vrot.slane %v699, 2
    %v919 = vrot.slane %v700, 2
    %v920 = vsel %vm283, %v918, %v919
    %v921 = vrot.slane %v701, 2
    %v922 = vrot.slane %v702, 2
    %v923 = vsel %vm283, %v921, %v922
    %v924 = vrot.slane %v703, 2
    %v925 = vrot.slane %v704, 2
    %v926 = vsel %vm283, %v924, %v925
    %v939 = vsel %vm283, %v910, %v850
    %v940 = vsel %vm283, %v913, %v853
    %v941 = vsel %vm283, %v916, %v856
    %v942 = vsel %vm283, %v919, %v859
    %v943 = vsel %vm283, %v922, %v862
    %v944 = vsel %vm283, %v925, %v865
    %v945 = vsel %vm222, %v939, %v694
    %v946 = vsel %vm222, %v940, %v696
    %v947 = vsel %vm222, %v941, %v698
    %v948 = vsel %vm222, %v942, %v700
    %v949 = vsel %vm222, %v943, %v702
    %v950 = vsel %vm222, %v944, %v704
    %v951 = vmul.f32 %v911, 0.05
    %v952 = vmul.f32 %v945, 0.05
    %v953 = vmul.f32 %v914, 0.05
    %v954 = vmul.f32 %v946, 0.05
    %v955 = vmul.f32 %v917, 0.05
    %v956 = vmul.f32 %v947, 0.05
    %v957 = vmul.f32 %v920, 0.05
    %v958 = vmul.f32 %v948, 0.05
    %v959 = vmul.f32 %v923, 0.05
    %v960 = vmul.f32 %v949, 0.05
    %v961 = vmul.f32 %v926, 0.05
    %v962 = vmul.f32 %v950, 0.05
    %v963 = vadd.f32 %v897, %v951
    %v964 = vadd.f32 %v898, %v952
    %v965 = vadd.f32 %v899, %v953
    %v966 = vadd.f32 %v900, %v954
    %v967 = vadd.f32 %v901, %v955
    %v968 = vadd.f32 %v902, %v956
    %v969 = vadd.f32 %v903, %v957
    %v970 = vadd.f32 %v904, %v958
    %v971 = vadd.f32 %v905, %v959
    %v972 = vadd.f32 %v906, %v960
    %v973 = vadd.f32 %v907, %v961
    %v974 = vadd.f32 %v908, %v962
    %987 = vrot.lane.b32.xlu0 %v963, 1
    %v988 = vpop.permute.xlu0 %987
    %989 = vrot.lane.b32.xlu0 %v964, 1
    %v990 = vpop.permute.xlu0 %989
    %991 = vrot.lane.b32.xlu0 %v965, 1
    %v992 = vpop.permute.xlu0 %991
    %993 = vrot.lane.b32.xlu0 %v966, 1
    %v994 = vpop.permute.xlu0 %993
    %995 = vrot.lane.b32.xlu0 %v967, 1
    %v996 = vpop.permute.xlu0 %995
    %997 = vrot.lane.b32.xlu0 %v968, 1
    %v998 = vpop.permute.xlu0 %997
    %999 = vrot.lane.b32.xlu0 %v969, 1
    %v1000 = vpop.permute.xlu0 %999
    %1001 = vrot.lane.b32.xlu0 %v970, 1
    %v1002 = vpop.permute.xlu0 %1001
    %1003 = vrot.lane.b32.xlu0 %v971, 1
    %v1004 = vpop.permute.xlu0 %1003
    %1005 = vrot.lane.b32.xlu0 %v972, 1
    %v1006 = vpop.permute.xlu0 %1005
    %1007 = vrot.lane.b32.xlu0 %v973, 1
    %v1008 = vpop.permute.xlu0 %1007
    %1009 = vrot.lane.b32.xlu0 %v974, 1
    %v1010 = vpop.permute.xlu0 %1009
    %1023 = vrot.lane.b32.xlu0 %v963, 2
    %v1024 = vpop.permute.xlu0 %1023
    %1025 = vrot.lane.b32.xlu0 %v964, 2
    %v1026 = vpop.permute.xlu0 %1025
    %1027 = vrot.lane.b32.xlu0 %v965, 2
    %v1028 = vpop.permute.xlu0 %1027
    %1029 = vrot.lane.b32.xlu0 %v966, 2
    %v1030 = vpop.permute.xlu0 %1029
    %1031 = vrot.lane.b32.xlu0 %v967, 2
    %v1032 = vpop.permute.xlu0 %1031
    %1033 = vrot.lane.b32.xlu0 %v968, 2
    %v1034 = vpop.permute.xlu0 %1033
    %1035 = vrot.lane.b32.xlu0 %v969, 2
    %v1036 = vpop.permute.xlu0 %1035
    %1037 = vrot.lane.b32.xlu0 %v970, 2
    %v1038 = vpop.permute.xlu0 %1037
    %1039 = vrot.lane.b32.xlu0 %v971, 2
    %v1040 = vpop.permute.xlu0 %1039
    %1041 = vrot.lane.b32.xlu0 %v972, 2
    %v1042 = vpop.permute.xlu0 %1041
    %1043 = vrot.lane.b32.xlu0 %v973, 2
    %v1044 = vpop.permute.xlu0 %1043
    %1045 = vrot.lane.b32.xlu0 %v974, 2
    %v1046 = vpop.permute.xlu0 %1045
    %v1059 = vsel %vm434, %v963, %v988
    %v1060 = vsel %vm434, %v964, %v990
    %v1061 = vsel %vm434, %v965, %v992
    %v1062 = vsel %vm434, %v966, %v994
    %v1063 = vsel %vm434, %v967, %v996
    %v1064 = vsel %vm434, %v968, %v998
    %v1065 = vsel %vm434, %v969, %v1000
    %v1066 = vsel %vm434, %v970, %v1002
    %v1067 = vsel %vm434, %v971, %v1004
    %v1068 = vsel %vm434, %v972, %v1006
    %v1069 = vsel %vm434, %v973, %v1008
    %v1070 = vsel %vm434, %v974, %v1010
    %v1071 = vsel %vm447, %v1059, %v1024
    %v1072 = vsel %vm447, %v1060, %v1026
    %v1073 = vsel %vm447, %v1061, %v1028
    %v1074 = vsel %vm447, %v1062, %v1030
    %v1075 = vsel %vm447, %v1063, %v1032
    %v1076 = vsel %vm447, %v1064, %v1034
    %v1077 = vsel %vm447, %v1065, %v1036
    %v1078 = vsel %vm447, %v1066, %v1038
    %v1079 = vsel %vm447, %v1067, %v1040
    %v1080 = vsel %vm447, %v1068, %v1042
    %v1081 = vsel %vm447, %v1069, %v1044
    %v1082 = vsel %vm447, %v1070, %v1046
    %v1083 = vmul.f32 %v1071, 0.05
    %v1084 = vmul.f32 %v1072, 0.05
    %v1085 = vmul.f32 %v1073, 0.05
    %v1086 = vmul.f32 %v1074, 0.05
    %v1087 = vmul.f32 %v1075, 0.05
    %v1088 = vmul.f32 %v1076, 0.05
    %v1089 = vmul.f32 %v1077, 0.05
    %v1090 = vmul.f32 %v1078, 0.05
    %v1091 = vmul.f32 %v1079, 0.05
    %v1092 = vmul.f32 %v1080, 0.05
    %v1093 = vmul.f32 %v1081, 0.05
    %v1094 = vmul.f32 %v1082, 0.05
    %v1095 = vmul.f32 %v1059, 0.25
    %v1096 = vmul.f32 %v1060, 0.25
    %v1097 = vmul.f32 %v1061, 0.25
    %v1098 = vmul.f32 %v1062, 0.25
    %v1099 = vmul.f32 %v1063, 0.25
    %v1100 = vmul.f32 %v1064, 0.25
    %v1101 = vmul.f32 %v1065, 0.25
    %v1102 = vmul.f32 %v1066, 0.25
    %v1103 = vmul.f32 %v1067, 0.25
    %v1104 = vmul.f32 %v1068, 0.25
    %v1105 = vmul.f32 %v1069, 0.25
    %v1106 = vmul.f32 %v1070, 0.25
    %v1107 = vadd.f32 %v1083, %v1095
    %v1108 = vadd.f32 %v1084, %v1096
    %v1109 = vadd.f32 %v1085, %v1097
    %v1110 = vadd.f32 %v1086, %v1098
    %v1111 = vadd.f32 %v1087, %v1099
    %v1112 = vadd.f32 %v1088, %v1100
    %v1113 = vadd.f32 %v1089, %v1101
    %v1114 = vadd.f32 %v1090, %v1102
    %v1115 = vadd.f32 %v1091, %v1103
    %v1116 = vadd.f32 %v1092, %v1104
    %v1117 = vadd.f32 %v1093, %v1105
    %v1118 = vadd.f32 %v1094, %v1106
    %v1119 = vmul.f32 %v963, 0.4
    %v1120 = vmul.f32 %v964, 0.4
    %v1121 = vmul.f32 %v965, 0.4
    %v1122 = vmul.f32 %v966, 0.4
    %v1123 = vmul.f32 %v967, 0.4
    %v1124 = vmul.f32 %v968, 0.4
    %v1125 = vmul.f32 %v969, 0.4
    %v1126 = vmul.f32 %v970, 0.4
    %v1127 = vmul.f32 %v971, 0.4
    %v1128 = vmul.f32 %v972, 0.4
    %v1129 = vmul.f32 %v973, 0.4
    %v1130 = vmul.f32 %v974, 0.4
    %v1131 = vadd.f32 %v1107, %v1119
    %v1132 = vadd.f32 %v1108, %v1120
    %v1133 = vadd.f32 %v1109, %v1121
    %v1134 = vadd.f32 %v1110, %v1122
    %v1135 = vadd.f32 %v1111, %v1123
    %v1136 = vadd.f32 %v1112, %v1124
    %v1137 = vadd.f32 %v1113, %v1125
    %v1138 = vadd.f32 %v1114, %v1126
    %v1139 = vadd.f32 %v1115, %v1127
    %v1140 = vadd.f32 %v1116, %v1128
    %v1141 = vadd.f32 %v1117, %v1129
    %v1142 = vadd.f32 %v1118, %v1130
    %1143 = vrot.lane.b32.xlu0 %v963, 127
    %v1144 = vpop.permute.xlu0 %1143
    %1145 = vrot.lane.b32.xlu0 %v964, 127
    %v1146 = vpop.permute.xlu0 %1145
    %1147 = vrot.lane.b32.xlu0 %v965, 127
    %v1148 = vpop.permute.xlu0 %1147
    %1149 = vrot.lane.b32.xlu0 %v966, 127
    %v1150 = vpop.permute.xlu0 %1149
    %1151 = vrot.lane.b32.xlu0 %v967, 127
    %v1152 = vpop.permute.xlu0 %1151
    %1153 = vrot.lane.b32.xlu0 %v968, 127
    %v1154 = vpop.permute.xlu0 %1153
    %1155 = vrot.lane.b32.xlu0 %v969, 127
    %v1156 = vpop.permute.xlu0 %1155
    %1157 = vrot.lane.b32.xlu0 %v970, 127
    %v1158 = vpop.permute.xlu0 %1157
    %1159 = vrot.lane.b32.xlu0 %v971, 127
    %v1160 = vpop.permute.xlu0 %1159
    %1161 = vrot.lane.b32.xlu0 %v972, 127
    %v1162 = vpop.permute.xlu0 %1161
    %1163 = vrot.lane.b32.xlu0 %v973, 127
    %v1164 = vpop.permute.xlu0 %1163
    %1165 = vrot.lane.b32.xlu0 %v974, 127
    %v1166 = vpop.permute.xlu0 %1165
    %v1179 = vsel %vm556, %v1144, %v963
    %v1180 = vsel %vm556, %v1146, %v964
    %v1181 = vsel %vm556, %v1148, %v965
    %v1182 = vsel %vm556, %v1150, %v966
    %v1183 = vsel %vm556, %v1152, %v967
    %v1184 = vsel %vm556, %v1154, %v968
    %v1185 = vsel %vm556, %v1156, %v969
    %v1186 = vsel %vm556, %v1158, %v970
    %v1187 = vsel %vm556, %v1160, %v971
    %v1188 = vsel %vm556, %v1162, %v972
    %v1189 = vsel %vm556, %v1164, %v973
    %v1190 = vsel %vm556, %v1166, %v974
    %v1191 = vmul.f32 %v1179, 0.25
    %v1192 = vmul.f32 %v1180, 0.25
    %v1193 = vmul.f32 %v1181, 0.25
    %v1194 = vmul.f32 %v1182, 0.25
    %v1195 = vmul.f32 %v1183, 0.25
    %v1196 = vmul.f32 %v1184, 0.25
    %v1197 = vmul.f32 %v1185, 0.25
    %v1198 = vmul.f32 %v1186, 0.25
    %v1199 = vmul.f32 %v1187, 0.25
    %v1200 = vmul.f32 %v1188, 0.25
    %v1201 = vmul.f32 %v1189, 0.25
    %v1202 = vmul.f32 %v1190, 0.25
    %v1203 = vadd.f32 %v1131, %v1191
    %v1204 = vadd.f32 %v1132, %v1192
    %v1205 = vadd.f32 %v1133, %v1193
    %v1206 = vadd.f32 %v1134, %v1194
    %v1207 = vadd.f32 %v1135, %v1195
    %v1208 = vadd.f32 %v1136, %v1196
    %v1209 = vadd.f32 %v1137, %v1197
    %v1210 = vadd.f32 %v1138, %v1198
    %v1211 = vadd.f32 %v1139, %v1199
    %v1212 = vadd.f32 %v1140, %v1200
    %v1213 = vadd.f32 %v1141, %v1201
    %v1214 = vadd.f32 %v1142, %v1202
    %1215 = vrot.lane.b32.xlu0 %v963, 126
    %v1216 = vpop.permute.xlu0 %1215
    %1217 = vrot.lane.b32.xlu0 %v964, 126
    %v1218 = vpop.permute.xlu0 %1217
    %1219 = vrot.lane.b32.xlu0 %v965, 126
    %v1220 = vpop.permute.xlu0 %1219
    %1221 = vrot.lane.b32.xlu0 %v966, 126
    %v1222 = vpop.permute.xlu0 %1221
    %1223 = vrot.lane.b32.xlu0 %v967, 126
    %v1224 = vpop.permute.xlu0 %1223
    %1225 = vrot.lane.b32.xlu0 %v968, 126
    %v1226 = vpop.permute.xlu0 %1225
    %1227 = vrot.lane.b32.xlu0 %v969, 126
    %v1228 = vpop.permute.xlu0 %1227
    %1229 = vrot.lane.b32.xlu0 %v970, 126
    %v1230 = vpop.permute.xlu0 %1229
    %1231 = vrot.lane.b32.xlu0 %v971, 126
    %v1232 = vpop.permute.xlu0 %1231
    %1233 = vrot.lane.b32.xlu0 %v972, 126
    %v1234 = vpop.permute.xlu0 %1233
    %1235 = vrot.lane.b32.xlu0 %v973, 126
    %v1236 = vpop.permute.xlu0 %1235
    %1237 = vrot.lane.b32.xlu0 %v974, 126
    %v1238 = vpop.permute.xlu0 %1237
    %v1251 = vsel %vm629, %v1216, %v1144
    %v1252 = vsel %vm629, %v1218, %v1146
    %v1253 = vsel %vm629, %v1220, %v1148
    %v1254 = vsel %vm629, %v1222, %v1150
    %v1255 = vsel %vm629, %v1224, %v1152
    %v1256 = vsel %vm629, %v1226, %v1154
    %v1257 = vsel %vm629, %v1228, %v1156
    %v1258 = vsel %vm629, %v1230, %v1158
    %v1259 = vsel %vm629, %v1232, %v1160
    %v1260 = vsel %vm629, %v1234, %v1162
    %v1261 = vsel %vm629, %v1236, %v1164
    %v1262 = vsel %vm629, %v1238, %v1166
    %v1263 = vsel %vm556, %v1251, %v963
    %v1264 = vsel %vm556, %v1252, %v964
    %v1265 = vsel %vm556, %v1253, %v965
    %v1266 = vsel %vm556, %v1254, %v966
    %v1267 = vsel %vm556, %v1255, %v967
    %v1268 = vsel %vm556, %v1256, %v968
    %v1269 = vsel %vm556, %v1257, %v969
    %v1270 = vsel %vm556, %v1258, %v970
    %v1271 = vsel %vm556, %v1259, %v971
    %v1272 = vsel %vm556, %v1260, %v972
    %v1273 = vsel %vm556, %v1261, %v973
    %v1274 = vsel %vm556, %v1262, %v974
    %v1275 = vmul.f32 %v1263, 0.05
    %v1276 = vmul.f32 %v1264, 0.05
    %v1277 = vmul.f32 %v1265, 0.05
    %v1278 = vmul.f32 %v1266, 0.05
    %v1279 = vmul.f32 %v1267, 0.05
    %v1280 = vmul.f32 %v1268, 0.05
    %v1281 = vmul.f32 %v1269, 0.05
    %v1282 = vmul.f32 %v1270, 0.05
    %v1283 = vmul.f32 %v1271, 0.05
    %v1284 = vmul.f32 %v1272, 0.05
    %v1285 = vmul.f32 %v1273, 0.05
    %v1286 = vmul.f32 %v1274, 0.05
    %v1287 = vadd.f32 %v1203, %v1275
    %v1288 = vadd.f32 %v1204, %v1276
    %v1289 = vadd.f32 %v1205, %v1277
    %v1290 = vadd.f32 %v1206, %v1278
    %v1291 = vadd.f32 %v1207, %v1279
    %v1292 = vadd.f32 %v1208, %v1280
    %v1293 = vadd.f32 %v1209, %v1281
    %v1294 = vadd.f32 %v1210, %v1282
    %v1295 = vadd.f32 %v1211, %v1283
    %v1296 = vadd.f32 %v1212, %v1284
    %v1297 = vadd.f32 %v1213, %v1285
    %v1298 = vadd.f32 %v1214, %v1286
    %v1299 = vsub.f32 %v64, %v1287
    %v1300 = vsub.f32 %v65, %v1288
    %v1301 = vsub.f32 %v66, %v1289
    %v1302 = vsub.f32 %v67, %v1290
    %v1303 = vsub.f32 %v68, %v1291
    %v1304 = vsub.f32 %v69, %v1292
    %v1305 = vsub.f32 %v70, %v1293
    %v1306 = vsub.f32 %v71, %v1294
    %v1307 = vsub.f32 %v72, %v1295
    %v1308 = vsub.f32 %v73, %v1296
    %v1309 = vsub.f32 %v74, %v1297
    %v1310 = vsub.f32 %v75, %v1298
    %v1311 = vmul.f32 %v1299, %v1299
    %v1312 = vmul.f32 %v1300, %v1300
    %v1313 = vmul.f32 %v1301, %v1301
    %v1314 = vmul.f32 %v1302, %v1302
    %v1315 = vmul.f32 %v1303, %v1303
    %v1316 = vmul.f32 %v1304, %v1304
    %v1317 = vmul.f32 %v1305, %v1305
    %v1318 = vmul.f32 %v1306, %v1306
    %v1319 = vmul.f32 %v1307, %v1307
    %v1320 = vmul.f32 %v1308, %v1308
    %v1321 = vmul.f32 %v1309, %v1309
    %v1322 = vmul.f32 %v1310, %v1310
    %v1323 = vadd.f32 %v1311, 1e-06
    %v1324 = vadd.f32 %v1312, 1e-06
    %v1325 = vadd.f32 %v1313, 1e-06
    %v1326 = vadd.f32 %v1314, 1e-06
    %v1327 = vadd.f32 %v1315, 1e-06
    %v1328 = vadd.f32 %v1316, 1e-06
    %v1329 = vadd.f32 %v1317, 1e-06
    %v1330 = vadd.f32 %v1318, 1e-06
    %v1331 = vadd.f32 %v1319, 1e-06
    %v1332 = vadd.f32 %v1320, 1e-06
    %v1333 = vadd.f32 %v1321, 1e-06
    %v1334 = vadd.f32 %v1322, 1e-06
    %v1335 = vrsqrt.pop %v1323
    %v1336 = vmul.f32 %v1323, %v1335
    %vm1337 = vcmp.eq.f32.partialorder %v1323, inf
    %v1338 = vsel %vm1337, %v1323, %v1336
    %vm1339 = vcmp.eq.f32.partialorder %v1323, 0.0
    %v1340 = vand.u32 %v1323, 2147483648
    %v1341 = vsel %vm1339, %v1340, %v1338
    %v1342 = vrsqrt.pop %v1324
    %v1343 = vmul.f32 %v1324, %v1342
    %vm1344 = vcmp.eq.f32.partialorder %v1324, inf
    %v1345 = vsel %vm1344, %v1324, %v1343
    %vm1346 = vcmp.eq.f32.partialorder %v1324, 0.0
    %v1347 = vand.u32 %v1324, 2147483648
    %v1348 = vsel %vm1346, %v1347, %v1345
    %v1349 = vrsqrt.pop %v1325
    %v1350 = vmul.f32 %v1325, %v1349
    %vm1351 = vcmp.eq.f32.partialorder %v1325, inf
    %v1352 = vsel %vm1351, %v1325, %v1350
    %vm1353 = vcmp.eq.f32.partialorder %v1325, 0.0
    %v1354 = vand.u32 %v1325, 2147483648
    %v1355 = vsel %vm1353, %v1354, %v1352
    %v1356 = vrsqrt.pop %v1326
    %v1357 = vmul.f32 %v1326, %v1356
    %vm1358 = vcmp.eq.f32.partialorder %v1326, inf
    %v1359 = vsel %vm1358, %v1326, %v1357
    %vm1360 = vcmp.eq.f32.partialorder %v1326, 0.0
    %v1361 = vand.u32 %v1326, 2147483648
    %v1362 = vsel %vm1360, %v1361, %v1359
    %v1363 = vrsqrt.pop %v1327
    %v1364 = vmul.f32 %v1327, %v1363
    %vm1365 = vcmp.eq.f32.partialorder %v1327, inf
    %v1366 = vsel %vm1365, %v1327, %v1364
    %vm1367 = vcmp.eq.f32.partialorder %v1327, 0.0
    %v1368 = vand.u32 %v1327, 2147483648
    %v1369 = vsel %vm1367, %v1368, %v1366
    %v1370 = vrsqrt.pop %v1328
    %v1371 = vmul.f32 %v1328, %v1370
    %vm1372 = vcmp.eq.f32.partialorder %v1328, inf
    %v1373 = vsel %vm1372, %v1328, %v1371
    %vm1374 = vcmp.eq.f32.partialorder %v1328, 0.0
    %v1375 = vand.u32 %v1328, 2147483648
    %v1376 = vsel %vm1374, %v1375, %v1373
    %v1377 = vrsqrt.pop %v1329
    %v1378 = vmul.f32 %v1329, %v1377
    %vm1379 = vcmp.eq.f32.partialorder %v1329, inf
    %v1380 = vsel %vm1379, %v1329, %v1378
    %vm1381 = vcmp.eq.f32.partialorder %v1329, 0.0
    %v1382 = vand.u32 %v1329, 2147483648
    %v1383 = vsel %vm1381, %v1382, %v1380
    %v1384 = vrsqrt.pop %v1330
    %v1385 = vmul.f32 %v1330, %v1384
    %vm1386 = vcmp.eq.f32.partialorder %v1330, inf
    %v1387 = vsel %vm1386, %v1330, %v1385
    %vm1388 = vcmp.eq.f32.partialorder %v1330, 0.0
    %v1389 = vand.u32 %v1330, 2147483648
    %v1390 = vsel %vm1388, %v1389, %v1387
    %v1391 = vrsqrt.pop %v1331
    %v1392 = vmul.f32 %v1331, %v1391
    %vm1393 = vcmp.eq.f32.partialorder %v1331, inf
    %v1394 = vsel %vm1393, %v1331, %v1392
    %vm1395 = vcmp.eq.f32.partialorder %v1331, 0.0
    %v1396 = vand.u32 %v1331, 2147483648
    %v1397 = vsel %vm1395, %v1396, %v1394
    %v1398 = vrsqrt.pop %v1332
    %v1399 = vmul.f32 %v1332, %v1398
    %vm1400 = vcmp.eq.f32.partialorder %v1332, inf
    %v1401 = vsel %vm1400, %v1332, %v1399
    %vm1402 = vcmp.eq.f32.partialorder %v1332, 0.0
    %v1403 = vand.u32 %v1332, 2147483648
    %v1404 = vsel %vm1402, %v1403, %v1401
    %v1405 = vrsqrt.pop %v1333
    %v1406 = vmul.f32 %v1333, %v1405
    %vm1407 = vcmp.eq.f32.partialorder %v1333, inf
    %v1408 = vsel %vm1407, %v1333, %v1406
    %vm1409 = vcmp.eq.f32.partialorder %v1333, 0.0
    %v1410 = vand.u32 %v1333, 2147483648
    %v1411 = vsel %vm1409, %v1410, %v1408
    %v1412 = vrsqrt.pop %v1334
    %v1413 = vmul.f32 %v1334, %v1412
    %vm1414 = vcmp.eq.f32.partialorder %v1334, inf
    %v1415 = vsel %vm1414, %v1334, %v1413
    %vm1416 = vcmp.eq.f32.partialorder %v1334, 0.0
    %v1417 = vand.u32 %v1334, 2147483648
    %v1418 = vsel %vm1416, %v1417, %v1415
    %vm1419 = vcmask 130048
    %v1420 = vsel %vm1419, %v1341, 0.0
    %v1421 = vsel %vm1419, %v1348, 0.0
    %v1422 = vadd.f32 %v1420, %v1421
    %v1423 = vsel %vm1419, %v1355, 0.0
    %v1424 = vadd.f32 %v1422, %v1423
    %v1425 = vsel %vm1419, %v1362, 0.0
    %v1426 = vadd.f32 %v1424, %v1425
    %v1427 = vsel %vm1419, %v1369, 0.0
    %v1428 = vadd.f32 %v1426, %v1427
    %v1429 = vsel %vm1419, %v1376, 0.0
    %v1430 = vadd.f32 %v1428, %v1429
    %v1431 = vsel %vm1419, %v1383, 0.0
    %v1432 = vadd.f32 %v1430, %v1431
    %v1433 = vsel %vm1419, %v1390, 0.0
    %v1434 = vadd.f32 %v1432, %v1433
    %v1435 = vsel %vm1419, %v1397, 0.0
    %v1436 = vadd.f32 %v1434, %v1435
    %v1437 = vsel %vm1419, %v1404, 0.0
    %v1438 = vadd.f32 %v1436, %v1437
    %v1439 = vsel %vm1419, %v1411, 0.0
    %v1440 = vadd.f32 %v1438, %v1439
    %v1441 = vsel %vm1419, %v1418, 0.0
    %v1442 = vadd.f32 %v1440, %v1441
    %1443 = vadd.xlane.f32.xlu0 %v1442
    %v1444 = vpop.xlane.xlu0 %1443
    %v1445 = vrot.slane %v1444, 4
    %v1446 = vadd.f32 %v1444, %v1445
    %v1447 = vrot.slane %v1446, 2
    %v1448 = vadd.f32 %v1446, %v1447
    %v1449 = vrot.slane %v1448, 1
    %v1450 = vadd.f32 %v1448, %v1449
    %s1451 = vtos %v1450
    %v1452 = vstv %s1451
    %vm1453 = vcmask 0
    %1454 = vst.msk [vmem:[#allocation7] sm:$0x1] %vm1453, %v1452
    // Predicated region
    $region18: #{tpu_custom_call.1} parent=1 // pred_check
      _
    $region19: #{tpu_custom_call.1} parent=1 // pred_check_branch
      %1456 = sbr.rel (0) target = $region21
    $region20: #{tpu_custom_call.1} parent=1 // pred_region
      %s1458 = ssub.s32 16, 16
      %1459 = vsyncadd [#allocation4], %s1458
      %s1461 = sshll.u32 [#allocation7], 4
      %s1462 = int_to_ptr.vmem [resolvable:$true] %s1461
      %1464 = dma.vmem_to_hbm [thread:$0]  %s1462, 16, %s2, [#allocation4]
    $region21: #{tpu_custom_call.1} parent=1 // pred_fallthru
      _
    // Predicated region
    $region22: #{tpu_custom_call.1} parent=1 // pred_check
      _
    $region23: #{tpu_custom_call.1} parent=1 // pred_check_branch
      %1466 = sbr.rel (0) target = $region25
    $region24: #{tpu_custom_call.1} parent=1 // pred_region
      %1467 = dma.done [#allocation4], 16
    $region25: #{tpu_custom_call.1} parent=1 // pred_fallthru
      _
    %1468 = vsyncpa [#allocation3], 1
    %1469 = vsyncpa [#allocation6], 1
    %1470 = vsyncpa [#allocation4], 1

</llo_original>
